<compile_context>
chip_gen: v5e
topology: v5e:2x2
jax: 0.10.0
libtpu: 0.0.40
codegen_flags: <defaults>
</compile_context>

<pallas_src>
import functools

import jax
import jax.numpy as jnp
from jax import lax
from jax.experimental import pallas as pl
from jax.experimental.pallas import tpu as pltpu

_LANE = 128
_SUBLANE = 8


# ---------------------------------------------------------------------------
# Kernels
# ---------------------------------------------------------------------------

def _fused_edge_mlp_kernel(idx_ref, h_ref, w1_ref, w2_ref, b_ref, out_ref):
    """Fused in-VMEM gather + edge MLP, lane-dense [C, tile] output.

    idx_ref : [2, tile] int32  (row 0 = src ids, row 1 = dst ids)
    h_ref   : [N, F]           node features, resident in VMEM
    w1_ref  : [C, F]           weight half acting on h_src
    w2_ref  : [C, F]           weight half acting on h_dst
    b_ref   : [C, 1]           bias (broadcast over the edge/lane axis)
    out_ref : [C, tile]        transposed scores (wrapper transposes back)
    """
    # TODO(synk): verify with pl.lower_as_mlir that this full-ref read + take
    # does not re-materialize the resident [N, F] block every grid step, and
    # whether routing src/dst through num_scalar_prefetch (SMEM) is cheaper
    # for small E on the local toolchain.
    h = h_ref[...]
    idx = idx_ref[...]                                  # [2, tile]
    h_u = jnp.take(h, idx[0], axis=0)                   # [tile, F] in-VMEM gather
    h_v = jnp.take(h, idx[1], axis=0)                   # [tile, F]
    # Contract F against F so the f32 accumulator is [C, tile]: ~tile/128 vregs
    # (C=8 rows on sublanes, long edge axis on lanes) and the store is an
    # unmasked, lane-dense vst.
    dn = (((1,), (1,)), ((), ()))
    acc = lax.dot_general(w1_ref[...], h_u, dn,
                          preferred_element_type=jnp.float32)
    acc = acc + lax.dot_general(w2_ref[...], h_v, dn,
                                preferred_element_type=jnp.float32)
    out_ref[...] = (acc + b_ref[...]).astype(out_ref.dtype)


def _pregathered_ct_kernel(hu_ref, hv_ref, w1_ref, w2_ref, b_ref, out_ref):
    """Pre-gathered endpoint features; lane-dense [C, tile] output."""
    dn = (((1,), (1,)), ((), ()))
    acc = lax.dot_general(w1_ref[...], hu_ref[...], dn,
                          preferred_element_type=jnp.float32)
    acc = acc + lax.dot_general(w2_ref[...], hv_ref[...], dn,
                                preferred_element_type=jnp.float32)
    out_ref[...] = (acc + b_ref[...]).astype(out_ref.dtype)


def _pregathered_tc_kernel(hu_ref, hv_ref, w1t_ref, w2t_ref, b_ref, out_ref):
    """Last-resort layout ([tile, C] store). Maximally conservative lowering."""
    acc = jnp.dot(hu_ref[...], w1t_ref[...], preferred_element_type=jnp.float32)
    acc = acc + jnp.dot(hv_ref[...], w2t_ref[...],
                        preferred_element_type=jnp.float32)
    out_ref[...] = (acc + b_ref[...]).astype(out_ref.dtype)


# ---------------------------------------------------------------------------
# Small helpers
# ---------------------------------------------------------------------------

def _round_up(x, m):
    return ((x + m - 1) // m) * m


def _padded_bytes(shape, dtype):
    """VMEM bytes of a 2-D block including (sublane, lane) layout padding."""
    r, c = shape
    itemsize = jnp.dtype(dtype).itemsize
    sub = _SUBLANE * max(1, 4 // itemsize)      # 8 (f32/i32) / 16 (bf16)
    return _round_up(max(int(r), 1), sub) * _round_up(max(int(c), 1), _LANE) * itemsize


def _col_bytes(rows, dtype):
    """Bytes per lane-column (i.e. per edge) of a [rows, tile] block."""
    itemsize = jnp.dtype(dtype).itemsize
    sub = _SUBLANE * max(1, 4 // itemsize)
    return _round_up(max(int(rows), 1), sub) * itemsize


def _tpu_info():
    """(vmem_capacity_bytes, tensorcores_per_chip) with conservative fallbacks."""
    vmem = 64 << 20            # v7x-sized default (smallest of the generations)
    cores = 1
    try:
        info = pltpu.get_tpu_info()
        vmem = int(getattr(info, "vmem_capacity_bytes", vmem))
        for name in ("num_cores", "core_count", "tensorcore_count",
                     "num_tensorcores"):
            v = getattr(info, name, None)
            if v:
                cores = int(v)
                break
    except Exception:
        pass
    try:
        kind = jax.devices()[0].device_kind.lower()
        if "7" in kind:        # v7x: 2 TensorCores per chip
            cores = max(cores, 2)
    except Exception:
        pass
    return vmem, cores


def _choose_tile(E, per_edge_bytes, budget_bytes, cores, max_tile):
    """Largest 128-multiple edge tile fitting the streamed-VMEM budget."""
    tile = int(max_tile)
    if per_edge_bytes > 0:
        tile = min(tile, int(budget_bytes // per_edge_bytes))
    if cores >= 2:
        # Keep >= 2 grid steps per TensorCore so the parallel edge axis can
        # shard across cores (v7x megacore). On single-TC chips (v5e/v6e) the
        # grid is a serial loop -> just take the largest tile that fits.
        tile = min(tile, max(E // (2 * cores), _LANE))
    tile = min(tile, _round_up(max(E, 1), _LANE))
    tile = max(_LANE, (tile // _LANE) * _LANE)
    return int(tile)


def _compiles(call, *avals):
    try:
        jax.jit(call).lower(*avals).compile()
        return True
    except Exception:
        return False


def _resident_kwargs(single_buffer):
    # Constant-index residents never change block index, so single-buffering
    # them only removes the wasted second VMEM buffer.
    return {"pipeline_mode": pl.Buffered(1)} if single_buffer else {}


@functools.lru_cache(maxsize=None)
def _buffered1_ok():
    """One-time probe: does this toolchain accept pipeline_mode=pl.Buffered(1)?"""
    try:
        def _k(x_ref, o_ref):
            o_ref[...] = x_ref[...] + 1.0
        call = pl.pallas_call(
            _k,
            out_shape=jax.ShapeDtypeStruct((8, 256), jnp.float32),
            grid=(2,),
            in_specs=[pl.BlockSpec((8, 256), lambda i: (0, 0),
                                   pipeline_mode=pl.Buffered(1))],
            out_specs=pl.BlockSpec((8, 128), lambda i: (0, i)),
        )
        return _compiles(call, jax.ShapeDtypeStruct((8, 256), jnp.float32))
    except Exception:
        return False


# ---------------------------------------------------------------------------
# pallas_call builders
# ---------------------------------------------------------------------------

def _build_fused_call(*, N, F, C, e_pad, edge_tile, feat_dtype, single_buffer,
                      vmem_limit):
    feat_dtype = jnp.dtype(feat_dtype)
    rk = _resident_kwargs(single_buffer)
    isz = feat_dtype.itemsize
    cost = pl.CostEstimate(
        flops=int(4 * e_pad * F * C),
        transcendentals=0,
        bytes_accessed=int(N * F * isz + 2 * C * F * isz
                           + 2 * e_pad * 4 + e_pad * C * 4))
    return pl.pallas_call(
        _fused_edge_mlp_kernel,
        out_shape=jax.ShapeDtypeStruct((C, e_pad), jnp.float32),
        grid_spec=pltpu.PrefetchScalarGridSpec(
            num_scalar_prefetch=0,
            grid=(e_pad // edge_tile,),
            in_specs=[
                pl.BlockSpec((2, edge_tile), lambda i: (0, i)),      # edge ids
                pl.BlockSpec((N, F), lambda i: (0, 0), **rk),        # h resident
                pl.BlockSpec((C, F), lambda i: (0, 0), **rk),        # W_src
                pl.BlockSpec((C, F), lambda i: (0, 0), **rk),        # W_dst
                pl.BlockSpec((C, 1), lambda i: (0, 0), **rk),        # bias
            ],
            out_specs=pl.BlockSpec((C, edge_tile), lambda i: (0, i)),
        ),
        compiler_params=pltpu.CompilerParams(
            dimension_semantics=("parallel",),
            vmem_limit_bytes=int(vmem_limit)),
        cost_estimate=cost,
    )


def _build_pre_ct_call(*, F, C, e_pad, edge_tile, feat_dtype, single_buffer,
                       vmem_limit):
    feat_dtype = jnp.dtype(feat_dtype)
    rk = _resident_kwargs(single_buffer)
    isz = feat_dtype.itemsize
    cost = pl.CostEstimate(
        flops=int(4 * e_pad * F * C),
        transcendentals=0,
        bytes_accessed=int(2 * e_pad * F * isz + 2 * C * F * isz
                           + e_pad * C * 4))
    return pl.pallas_call(
        _pregathered_ct_kernel,
        out_shape=jax.ShapeDtypeStruct((C, e_pad), jnp.float32),
        grid_spec=pltpu.PrefetchScalarGridSpec(
            num_scalar_prefetch=0,
            grid=(e_pad // edge_tile,),
            in_specs=[
                pl.BlockSpec((edge_tile, F), lambda i: (i, 0)),       # h_u tile
                pl.BlockSpec((edge_tile, F), lambda i: (i, 0)),       # h_v tile
                pl.BlockSpec((C, F), lambda i: (0, 0), **rk),         # W_src
                pl.BlockSpec((C, F), lambda i: (0, 0), **rk),         # W_dst
                pl.BlockSpec((C, 1), lambda i: (0, 0), **rk),         # bias
            ],
            out_specs=pl.BlockSpec((C, edge_tile), lambda i: (0, i)),
        ),
        compiler_params=pltpu.CompilerParams(
            dimension_semantics=("parallel",),
            vmem_limit_bytes=int(vmem_limit)),
        cost_estimate=cost,
    )


def _build_pre_tc_call(*, F, C, e_pad, edge_tile, feat_dtype, vmem_limit):
    feat_dtype = jnp.dtype(feat_dtype)
    isz = feat_dtype.itemsize
    cost = pl.CostEstimate(
        flops=int(4 * e_pad * F * C),
        transcendentals=0,
        bytes_accessed=int(2 * e_pad * F * isz + 2 * C * F * isz
                           + e_pad * C * 4))
    return pl.pallas_call(
        _pregathered_tc_kernel,
        out_shape=jax.ShapeDtypeStruct((e_pad, C), jnp.float32),
        grid_spec=pltpu.PrefetchScalarGridSpec(
            num_scalar_prefetch=0,
            grid=(e_pad // edge_tile,),
            in_specs=[
                pl.BlockSpec((edge_tile, F), lambda i: (i, 0)),
                pl.BlockSpec((edge_tile, F), lambda i: (i, 0)),
                pl.BlockSpec((F, C), lambda i: (0, 0)),
                pl.BlockSpec((F, C), lambda i: (0, 0)),
                pl.BlockSpec((1, C), lambda i: (0, 0)),
            ],
            out_specs=pl.BlockSpec((edge_tile, C), lambda i: (i, 0)),
        ),
        compiler_params=pltpu.CompilerParams(
            dimension_semantics=("parallel",),
            vmem_limit_bytes=int(vmem_limit)),
        cost_estimate=cost,
    )


# One-time cached AOT lower+compile probes (static selection; no per-call
# runtime try/except, no host sync).

@functools.lru_cache(maxsize=None)
def _fused_plan_ok(N, F, C, e_pad, tile, dtype_name, single_buffer, vmem_limit):
    dt = jnp.dtype(dtype_name)
    call = _build_fused_call(N=N, F=F, C=C, e_pad=e_pad, edge_tile=tile,
                             feat_dtype=dt, single_buffer=single_buffer,
                             vmem_limit=vmem_limit)
    return _compiles(
        call,
        jax.ShapeDtypeStruct((2, e_pad), jnp.int32),
        jax.ShapeDtypeStruct((N, F), dt),
        jax.ShapeDtypeStruct((C, F), dt),
        jax.ShapeDtypeStruct((C, F), dt),
        jax.ShapeDtypeStruct((C, 1), jnp.float32))


@functools.lru_cache(maxsize=None)
def _pre_ct_plan_ok(F, C, e_pad, tile, dtype_name, single_buffer, vmem_limit):
    dt = jnp.dtype(dtype_name)
    call = _build_pre_ct_call(F=F, C=C, e_pad=e_pad, edge_tile=tile,
                              feat_dtype=dt, single_buffer=single_buffer,
                              vmem_limit=vmem_limit)
    return _compiles(
        call,
        jax.ShapeDtypeStruct((e_pad, F), dt),
        jax.ShapeDtypeStruct((e_pad, F), dt),
        jax.ShapeDtypeStruct((C, F), dt),
        jax.ShapeDtypeStruct((C, F), dt),
        jax.ShapeDtypeStruct((C, 1), jnp.float32))


# ---------------------------------------------------------------------------
# Forward wrapper
# ---------------------------------------------------------------------------

def mlp_predictor_forward(h, src, dst, W, b, *, edge_tile=None,
                          stream_dtype=None, allow_fused_gather=True):
    """h: [N, F] node features; src/dst: [E] edge endpoints (int);
    W: [C, 2F] Linear weight (PyTorch layout); b: [C] bias.
    Returns score: [E, C] float32."""
    E = int(src.shape[0])
    N, F = int(h.shape[0]), int(h.shape[1])
    C = int(W.shape[0])
    assert int(W.shape[1]) == 2 * F

    feat_dtype = jnp.dtype(stream_dtype) if stream_dtype is not None \
        else jnp.dtype(h.dtype)
    isz = feat_dtype.itemsize
    h_f = h.astype(feat_dtype)
    W_f = W.astype(feat_dtype)
    W1, W2 = W_f[:, :F], W_f[:, F:]             # [C, F] halves (no in-kernel concat)
    bias_ct = b.astype(jnp.float32).reshape(C, 1)

    vmem_cap, cores = _tpu_info()
    # ~5/8 of physical VMEM (=> ~40 MiB on v7x's 64 MiB, 80 MiB on v5e/v6e).
    vmem_limit = int(min(vmem_cap * 5 // 8, 100 << 20))
    headroom = 2 << 20
    single_buffer = _buffered1_ok()
    buf_mult = 1 if single_buffer else 2
    max_tile_user = None
    if edge_tile is not None:
        max_tile_user = max(_LANE, (int(edge_tile) // _LANE) * _LANE)

    # ---- fused path: h resident in VMEM, in-kernel gather --------------------
    # Resident footprint uses (8,128)-padded sizes (F<128 pads to a full lane
    # group), times 1 or 2 depending on single-buffering support.
    res_fused = buf_mult * (_padded_bytes((N, F), feat_dtype)
                            + 2 * _padded_bytes((C, F), feat_dtype)
                            + _padded_bytes((C, 1), jnp.float32))
    per_edge_fused = (2 * _col_bytes(2, jnp.int32)          # idx stream (x2 bufs)
                      + 3 * _col_bytes(C, jnp.float32)      # out stream + acc
                      + 2 * _round_up(F, _LANE) * isz       # gathered h_u / h_v
                      + 2 * _col_bytes(F, feat_dtype))      # matmul staging
    fused_budget = vmem_limit - headroom - res_fused
    use_fused = allow_fused_gather and fused_budget >= _LANE * per_edge_fused
    if use_fused:
        tile_f = _choose_tile(E, per_edge_fused, fused_budget, cores,
                              max_tile_user or 2048)
        e_pad_f = _round_up(max(E, 1), tile_f)
        use_fused = _fused_plan_ok(N, F, C, e_pad_f, tile_f, feat_dtype.name,
                                   single_buffer, vmem_limit)
    if use_fused:
        eidx = jnp.stack([src.astype(jnp.int32), dst.astype(jnp.int32)])
        eidx = jnp.pad(eidx, ((0, 0), (0, e_pad_f - E)))
        call = _build_fused_call(N=N, F=F, C=C, e_pad=e_pad_f,
                                 edge_tile=tile_f, feat_dtype=feat_dtype,
                                 single_buffer=single_buffer,
                                 vmem_limit=vmem_limit)
        out_t = call(eidx, h_f, W1, W2, bias_ct)             # [C, e_pad]
        return out_t.T[:E]

    # ---- pre-gathered fallback (XLA gather = layout glue) --------------------
    res_pre = buf_mult * (2 * _padded_bytes((C, F), feat_dtype)
                          + _padded_bytes((C, 1), jnp.float32))
    per_edge_pre = (4 * _round_up(F, _LANE) * isz            # h_u/h_v (x2 bufs)
                    + 2 * _col_bytes(F, feat_dtype)          # matmul staging
                    + 3 * _col_bytes(C, jnp.float32))        # out stream + acc
    pre_budget = vmem_limit - headroom - res_pre
    tile_p = _choose_tile(E, per_edge_pre, pre_budget, cores,
                          max_tile_user or 4096)
    e_pad_p = _round_up(max(E, 1), tile_p)

    src_p = jnp.pad(src.astype(jnp.int32), (0, e_pad_p - E))
    dst_p = jnp.pad(dst.astype(jnp.int32), (0, e_pad_p - E))
    h_u = jnp.take(h_f, src_p, axis=0)                       # [e_pad, F]
    h_v = jnp.take(h_f, dst_p, axis=0)                       # [e_pad, F]

    if _pre_ct_plan_ok(F, C, e_pad_p, tile_p, feat_dtype.name, single_buffer,
                       vmem_limit):
        call = _build_pre_ct_call(F=F, C=C, e_pad=e_pad_p, edge_tile=tile_p,
                                  feat_dtype=feat_dtype,
                                  single_buffer=single_buffer,
                                  vmem_limit=vmem_limit)
        out_t = call(h_u, h_v, W1, W2, bias_ct)               # [C, e_pad]
        return out_t.T[:E]

    # Last resort: conservative edge-major layout (always lowers).
    call = _build_pre_tc_call(F=F, C=C, e_pad=e_pad_p, edge_tile=tile_p,
                              feat_dtype=feat_dtype, vmem_limit=vmem_limit)
    out = call(h_u, h_v, W1.T, W2.T, b.astype(jnp.float32).reshape(1, C))
    return out[:E]


# ---------------------------------------------------------------------------
# Demo / correctness check
# ---------------------------------------------------------------------------

if __name__ == "__main__":
    key = jax.random.PRNGKey(0)
    k_h, k_w, k_b, k_src, k_dst = jax.random.split(key, 5)

    # Small synthetic graph consistent with the module's forward.
    in_features = 32       # F
    out_classes = 8        # C
    num_nodes = 16         # N
    num_edges = 384        # E

    h = jax.random.normal(k_h, (num_nodes, in_features), dtype=jnp.float32)
    src = jax.random.randint(k_src, (num_edges,), 0, num_nodes, dtype=jnp.int32)
    dst = jax.random.randint(k_dst, (num_edges,), 0, num_nodes, dtype=jnp.int32)

    # nn.Linear(2F, C): W [C, 2F], b [C], U(-1/sqrt(fan_in), 1/sqrt(fan_in))
    fan_in = 2 * in_features
    bound = 1.0 / (fan_in ** 0.5)
    W = jax.random.uniform(k_w, (out_classes, fan_in), jnp.float32,
                           -bound, bound)
    b = jax.random.uniform(k_b, (out_classes,), jnp.float32, -bound, bound)

    # Pure-JAX reference (same math as the PyTorch module).
    ref = jnp.concatenate([h[src], h[dst]], axis=1) @ W.T + b

    # f32 run (tight check).
    score = jax.block_until_ready(mlp_predictor_forward(h, src, dst, W, b))
    assert score.shape == (num_edges, out_classes)
    assert jnp.allclose(score, ref, atol=1e-4, rtol=1e-4), "f32 mismatch"

    # bf16-streamed run (halves HBM/VMEM feature traffic); f32 accumulation.
    score_bf16 = jax.block_until_ready(
        mlp_predictor_forward(h, src, dst, W, b, stream_dtype=jnp.bfloat16))
    assert score_bf16.shape == (num_edges, out_classes)
    assert jnp.allclose(score_bf16, ref, atol=5e-2, rtol=5e-2), "bf16 mismatch"

    print("KERNEL_OK")
</pallas_src>

<mosaic_0001>
module attributes {stable_mosaic.version = 11 : i64} {
  func.func @_pregathered_tc_kernel(%arg0: i32, %arg1: memref<384x32xf32, #tpu.memory_space<vmem>>, %arg2: memref<384x32xf32, #tpu.memory_space<vmem>>, %arg3: memref<32x8xf32, #tpu.memory_space<vmem>>, %arg4: memref<32x8xf32, #tpu.memory_space<vmem>>, %arg5: memref<1x8xf32, #tpu.memory_space<vmem>>, %arg6: memref<384x8xf32, #tpu.memory_space<vmem>>) attributes {dimension_semantics = [#tpu.dimension_semantics<parallel>], iteration_bounds = array<i64: 1>, scalar_prefetch = 0 : i64, scratch_operands = 0 : i64, tpu.core_type = #tpu.core_type<tc>, window_params = [{transform_indices = @transform_0, window_bounds = array<i64: 384, 32>}, {transform_indices = @transform_1, window_bounds = array<i64: 384, 32>}, {pipeline_mode = #tpu.pipeline_mode<synchronous>, transform_indices = @transform_2, window_bounds = array<i64: 32, 8>}, {pipeline_mode = #tpu.pipeline_mode<synchronous>, transform_indices = @transform_3, window_bounds = array<i64: 32, 8>}, {pipeline_mode = #tpu.pipeline_mode<synchronous>, transform_indices = @transform_4, window_bounds = array<i64: 1, 8>}, {transform_indices = @transform_5, window_bounds = array<i64: 384, 8>}]} {
    %c0 = arith.constant 0 : index
    %c0_0 = arith.constant 0 : index
    %0 = vector.load %arg1[%c0, %c0_0] : memref<384x32xf32, #tpu.memory_space<vmem>>, vector<384x32xf32>
    %c0_1 = arith.constant 0 : index
    %c0_2 = arith.constant 0 : index
    %1 = vector.load %arg3[%c0_1, %c0_2] : memref<32x8xf32, #tpu.memory_space<vmem>>, vector<32x8xf32>
    %cst = arith.constant dense<0.000000e+00> : vector<384x8xf32>
    %2 = tpu.matmul %0, %1, %cst {dimension_numbers = #tpu.dot_dimension_numbers<[1], [0], [0], [1], [0, 0, 1, 1], [], []>} : vector<384x32xf32>, vector<32x8xf32>, vector<384x8xf32> -> vector<384x8xf32>
    %c0_3 = arith.constant 0 : index
    %c0_4 = arith.constant 0 : index
    %3 = vector.load %arg2[%c0_3, %c0_4] : memref<384x32xf32, #tpu.memory_space<vmem>>, vector<384x32xf32>
    %c0_5 = arith.constant 0 : index
    %c0_6 = arith.constant 0 : index
    %4 = vector.load %arg4[%c0_5, %c0_6] : memref<32x8xf32, #tpu.memory_space<vmem>>, vector<32x8xf32>
    %cst_7 = arith.constant dense<0.000000e+00> : vector<384x8xf32>
    %5 = tpu.matmul %3, %4, %cst_7 {dimension_numbers = #tpu.dot_dimension_numbers<[1], [0], [0], [1], [0, 0, 1, 1], [], []>} : vector<384x32xf32>, vector<32x8xf32>, vector<384x8xf32> -> vector<384x8xf32>
    %6 = arith.addf %2, %5 : vector<384x8xf32>
    %c0_8 = arith.constant 0 : index
    %c0_9 = arith.constant 0 : index
    %7 = vector.load %arg5[%c0_8, %c0_9] : memref<1x8xf32, #tpu.memory_space<vmem>>, vector<1x8xf32>
    %8 = vector.broadcast %7 : vector<1x8xf32> to vector<384x8xf32>
    %9 = arith.addf %6, %8 : vector<384x8xf32>
    %c0_10 = arith.constant 0 : index
    %c0_11 = arith.constant 0 : index
    %10 = vector.load %arg6[%c0_10, %c0_11] : memref<384x8xf32, #tpu.memory_space<vmem>>, vector<384x8xf32>
    tpu.vector_store %arg6[%c0_10, %c0_11], %9 {strides = array<i32>} : memref<384x8xf32, #tpu.memory_space<vmem>>, vector<384x8xf32>,
    return
  }
  func.func @transform_0(%arg0: i32) -> (i32, i32) {
    %c0_i32 = arith.constant 0 : i32
    %c0_i32_0 = arith.constant 0 : i32
    return %arg0, %c0_i32 : i32, i32
  }
  func.func @transform_1(%arg0: i32) -> (i32, i32) {
    %c0_i32 = arith.constant 0 : i32
    %c0_i32_0 = arith.constant 0 : i32
    return %arg0, %c0_i32 : i32, i32
  }
  func.func @transform_2(%arg0: i32) -> (i32, i32) {
    %c0_i32 = arith.constant 0 : i32
    %c0_i32_0 = arith.constant 0 : i32
    %c0_i32_1 = arith.constant 0 : i32
    return %c0_i32, %c0_i32_0 : i32, i32
  }
  func.func @transform_3(%arg0: i32) -> (i32, i32) {
    %c0_i32 = arith.constant 0 : i32
    %c0_i32_0 = arith.constant 0 : i32
    %c0_i32_1 = arith.constant 0 : i32
    return %c0_i32, %c0_i32_0 : i32, i32
  }
  func.func @transform_4(%arg0: i32) -> (i32, i32) {
    %c0_i32 = arith.constant 0 : i32
    %c0_i32_0 = arith.constant 0 : i32
    %c0_i32_1 = arith.constant 0 : i32
    return %c0_i32, %c0_i32_0 : i32, i32
  }
  func.func @transform_5(%arg0: i32) -> (i32, i32) {
    %c0_i32 = arith.constant 0 : i32
    %c0_i32_0 = arith.constant 0 : i32
    return %arg0, %c0_i32 : i32, i32
  }
}

</mosaic_0001>

<llo_original>
// kernel: tpu_custom_call.1
$region0: #{tpu_custom_call.1}
  #allocation0 [shape = 'u32[]', space=smem, size = 0x4, offset = 0x4, fixed_abs, tag = 'smem constant byte address 0x4 - core index']
  #allocation1 [shape = 'u32[72,128]{1,0:T(1,128)}', space=vmem, size = 0x9000, scoped, tag = 'internal scratch']
  %s0 = inlined_call_operand.vmem [shape: f32[384,32], index: 0, kind: input, shape index: {}]
  %s1 = inlined_call_operand.vmem [shape: f32[384,32], index: 1, kind: input, shape index: {}]
  %s2 = inlined_call_operand.vmem [shape: f32[32,8], index: 2, kind: input, shape index: {}]
  %s3 = inlined_call_operand.vmem [shape: f32[32,8], index: 3, kind: input, shape index: {}]
  %s4 = inlined_call_operand.vmem [shape: f32[1,8], index: 4, kind: input, shape index: {}]
  %s5 = inlined_call_operand.vmem [shape: f32[384,8], index: 5, kind: output, shape index: {}]
  %s6 = sld [smem:[#allocation0]]
  $region30: #{tpu_custom_call.1} parent=0
    _
  %s8 = ssub.s32 1, %s6
  %s9 = scalar_select 0, %s8, %s6
  // Predicated region
  $region2: #{tpu_custom_call.1} parent=0 // pred_check
    _
  $region3: #{tpu_custom_call.1} parent=0 // pred_check_branch
    %11 = sbr.rel (0) target = $region5
  $region4: #{tpu_custom_call.1} parent=0 // pred_region
    _
  $region5: #{tpu_custom_call.1} parent=0 // pred_fallthru
    _
  // Predicated region
  $region6: #{tpu_custom_call.1} parent=0 // pred_check
    _
  $region7: #{tpu_custom_call.1} parent=0 // pred_check_branch
    %13 = sbr.rel (0) target = $region9
  $region8: #{tpu_custom_call.1} parent=0 // pred_region
    _
  $region9: #{tpu_custom_call.1} parent=0 // pred_fallthru
    _
  // Predicated region
  $region10: #{tpu_custom_call.1} parent=0 // pred_check
    _
  $region11: #{tpu_custom_call.1} parent=0 // pred_check_branch
    %15 = sbr.rel (0) target = $region13
  $region12: #{tpu_custom_call.1} parent=0 // pred_region
    _
  $region13: #{tpu_custom_call.1} parent=0 // pred_fallthru
    _
  // Predicated region
  $region14: #{tpu_custom_call.1} parent=0 // pred_check
    _
  $region15: #{tpu_custom_call.1} parent=0 // pred_check_branch
    %17 = sbr.rel (0) target = $region17
  $region16: #{tpu_custom_call.1} parent=0 // pred_region
    _
  $region17: #{tpu_custom_call.1} parent=0 // pred_fallthru
    _
  // Predicated region
  $region18: #{tpu_custom_call.1} parent=0 // pred_check
    _
  $region19: #{tpu_custom_call.1} parent=0 // pred_check_branch
    %19 = sbr.rel (0) target = $region21
  $region20: #{tpu_custom_call.1} parent=0 // pred_region
    _
  $region21: #{tpu_custom_call.1} parent=0 // pred_fallthru
    _
  %v20 = vld [vmem:[%s0] sm:$0xff]
  %v21 = vld [vmem:[%s0 + $0x8] sm:$0xff]
  %v22 = vld [vmem:[%s0 + $0x10] sm:$0xff]
  %v23 = vld [vmem:[%s0 + $0x18] sm:$0xff]
  %v24 = vld [vmem:[%s0 + $0x20] sm:$0xff]
  %v25 = vld [vmem:[%s0 + $0x28] sm:$0xff]
  %v26 = vld [vmem:[%s0 + $0x30] sm:$0xff]
  %v27 = vld [vmem:[%s0 + $0x38] sm:$0xff]
  %v28 = vld [vmem:[%s0 + $0x40] sm:$0xff]
  %v29 = vld [vmem:[%s0 + $0x48] sm:$0xff]
  %v30 = vld [vmem:[%s0 + $0x50] sm:$0xff]
  %v31 = vld [vmem:[%s0 + $0x58] sm:$0xff]
  %v32 = vld [vmem:[%s0 + $0x60] sm:$0xff]
  %v33 = vld [vmem:[%s0 + $0x68] sm:$0xff]
  %v34 = vld [vmem:[%s0 + $0x70] sm:$0xff]
  %v35 = vld [vmem:[%s0 + $0x78] sm:$0xff]
  %v36 = vld [vmem:[%s0 + $0x80] sm:$0xff]
  %v37 = vld [vmem:[%s0 + $0x88] sm:$0xff]
  %v38 = vld [vmem:[%s0 + $0x90] sm:$0xff]
  %v39 = vld [vmem:[%s0 + $0x98] sm:$0xff]
  %v40 = vld [vmem:[%s0 + $0xa0] sm:$0xff]
  %v41 = vld [vmem:[%s0 + $0xa8] sm:$0xff]
  %v42 = vld [vmem:[%s0 + $0xb0] sm:$0xff]
  %v43 = vld [vmem:[%s0 + $0xb8] sm:$0xff]
  %v44 = vld [vmem:[%s0 + $0xc0] sm:$0xff]
  %v45 = vld [vmem:[%s0 + $0xc8] sm:$0xff]
  %v46 = vld [vmem:[%s0 + $0xd0] sm:$0xff]
  %v47 = vld [vmem:[%s0 + $0xd8] sm:$0xff]
  %v48 = vld [vmem:[%s0 + $0xe0] sm:$0xff]
  %v49 = vld [vmem:[%s0 + $0xe8] sm:$0xff]
  %v50 = vld [vmem:[%s0 + $0xf0] sm:$0xff]
  %v51 = vld [vmem:[%s0 + $0xf8] sm:$0xff]
  %v52 = vld [vmem:[%s0 + $0x100] sm:$0xff]
  %v53 = vld [vmem:[%s0 + $0x108] sm:$0xff]
  %v54 = vld [vmem:[%s0 + $0x110] sm:$0xff]
  %v55 = vld [vmem:[%s0 + $0x118] sm:$0xff]
  %v56 = vld [vmem:[%s0 + $0x120] sm:$0xff]
  %v57 = vld [vmem:[%s0 + $0x128] sm:$0xff]
  %v58 = vld [vmem:[%s0 + $0x130] sm:$0xff]
  %v59 = vld [vmem:[%s0 + $0x138] sm:$0xff]
  %v60 = vld [vmem:[%s0 + $0x140] sm:$0xff]
  %v61 = vld [vmem:[%s0 + $0x148] sm:$0xff]
  %v62 = vld [vmem:[%s0 + $0x150] sm:$0xff]
  %v63 = vld [vmem:[%s0 + $0x158] sm:$0xff]
  %v64 = vld [vmem:[%s0 + $0x160] sm:$0xff]
  %v65 = vld [vmem:[%s0 + $0x168] sm:$0xff]
  %v66 = vld [vmem:[%s0 + $0x170] sm:$0xff]
  %v67 = vld [vmem:[%s0 + $0x178] sm:$0xff]
  %v68 = vld [vmem:[%s2] sm:$0xff]
  %v69 = vld [vmem:[%s2 + $0x8] sm:$0xff]
  %v70 = vld [vmem:[%s2 + $0x10] sm:$0xff]
  %v71 = vld [vmem:[%s2 + $0x18] sm:$0xff]
  %v72 = vld [vmem:[%s1] sm:$0xff]
  %v73 = vld [vmem:[%s1 + $0x8] sm:$0xff]
  %v74 = vld [vmem:[%s1 + $0x10] sm:$0xff]
  %v75 = vld [vmem:[%s1 + $0x18] sm:$0xff]
  %v76 = vld [vmem:[%s1 + $0x20] sm:$0xff]
  %v77 = vld [vmem:[%s1 + $0x28] sm:$0xff]
  %v78 = vld [vmem:[%s1 + $0x30] sm:$0xff]
  %v79 = vld [vmem:[%s1 + $0x38] sm:$0xff]
  %v80 = vld [vmem:[%s1 + $0x40] sm:$0xff]
  %v81 = vld [vmem:[%s1 + $0x48] sm:$0xff]
  %v82 = vld [vmem:[%s1 + $0x50] sm:$0xff]
  %v83 = vld [vmem:[%s1 + $0x58] sm:$0xff]
  %v84 = vld [vmem:[%s1 + $0x60] sm:$0xff]
  %v85 = vld [vmem:[%s1 + $0x68] sm:$0xff]
  %v86 = vld [vmem:[%s1 + $0x70] sm:$0xff]
  %v87 = vld [vmem:[%s1 + $0x78] sm:$0xff]
  %v88 = vld [vmem:[%s1 + $0x80] sm:$0xff]
  %v89 = vld [vmem:[%s1 + $0x88] sm:$0xff]
  %v90 = vld [vmem:[%s1 + $0x90] sm:$0xff]
  %v91 = vld [vmem:[%s1 + $0x98] sm:$0xff]
  %v92 = vld [vmem:[%s1 + $0xa0] sm:$0xff]
  %v93 = vld [vmem:[%s1 + $0xa8] sm:$0xff]
  %v94 = vld [vmem:[%s1 + $0xb0] sm:$0xff]
  %v95 = vld [vmem:[%s1 + $0xb8] sm:$0xff]
  %v96 = vld [vmem:[%s1 + $0xc0] sm:$0xff]
  %v97 = vld [vmem:[%s1 + $0xc8] sm:$0xff]
  %v98 = vld [vmem:[%s1 + $0xd0] sm:$0xff]
  %v99 = vld [vmem:[%s1 + $0xd8] sm:$0xff]
  %v100 = vld [vmem:[%s1 + $0xe0] sm:$0xff]
  %v101 = vld [vmem:[%s1 + $0xe8] sm:$0xff]
  %v102 = vld [vmem:[%s1 + $0xf0] sm:$0xff]
  %v103 = vld [vmem:[%s1 + $0xf8] sm:$0xff]
  %v104 = vld [vmem:[%s1 + $0x100] sm:$0xff]
  %v105 = vld [vmem:[%s1 + $0x108] sm:$0xff]
  %v106 = vld [vmem:[%s1 + $0x110] sm:$0xff]
  %v107 = vld [vmem:[%s1 + $0x118] sm:$0xff]
  %v108 = vld [vmem:[%s1 + $0x120] sm:$0xff]
  %v109 = vld [vmem:[%s1 + $0x128] sm:$0xff]
  %v110 = vld [vmem:[%s1 + $0x130] sm:$0xff]
  %v111 = vld [vmem:[%s1 + $0x138] sm:$0xff]
  %v112 = vld [vmem:[%s1 + $0x140] sm:$0xff]
  %v113 = vld [vmem:[%s1 + $0x148] sm:$0xff]
  %v114 = vld [vmem:[%s1 + $0x150] sm:$0xff]
  %v115 = vld [vmem:[%s1 + $0x158] sm:$0xff]
  %v116 = vld [vmem:[%s1 + $0x160] sm:$0xff]
  %v117 = vld [vmem:[%s1 + $0x168] sm:$0xff]
  %v118 = vld [vmem:[%s1 + $0x170] sm:$0xff]
  %v119 = vld [vmem:[%s1 + $0x178] sm:$0xff]
  %v120 = vld [vmem:[%s3] sm:$0xff]
  %v121 = vld [vmem:[%s3 + $0x8] sm:$0xff]
  %v122 = vld [vmem:[%s3 + $0x10] sm:$0xff]
  %v123 = vld [vmem:[%s3 + $0x18] sm:$0xff]
  %vm124 = vcmask 261120
  %v126 = vsel %vm124, %v72, 0
  %v129 = vsel %vm124, %v73, 0
  %v132 = vsel %vm124, %v74, 0
  %v135 = vsel %vm124, %v75, 0
  %v138 = vsel %vm124, %v76, 0
  %v141 = vsel %vm124, %v77, 0
  %v144 = vsel %vm124, %v78, 0
  %v147 = vsel %vm124, %v79, 0
  %v150 = vsel %vm124, %v80, 0
  %v153 = vsel %vm124, %v81, 0
  %v156 = vsel %vm124, %v82, 0
  %v159 = vsel %vm124, %v83, 0
  %v162 = vsel %vm124, %v84, 0
  %v165 = vsel %vm124, %v85, 0
  %v168 = vsel %vm124, %v86, 0
  %v171 = vsel %vm124, %v87, 0
  %v174 = vsel %vm124, %v88, 0
  %v177 = vsel %vm124, %v89, 0
  %v180 = vsel %vm124, %v90, 0
  %v183 = vsel %vm124, %v91, 0
  %v186 = vsel %vm124, %v92, 0
  %v189 = vsel %vm124, %v93, 0
  %v192 = vsel %vm124, %v94, 0
  %v195 = vsel %vm124, %v95, 0
  %v198 = vsel %vm124, %v96, 0
  %v201 = vsel %vm124, %v97, 0
  %v204 = vsel %vm124, %v98, 0
  %v207 = vsel %vm124, %v99, 0
  %v210 = vsel %vm124, %v100, 0
  %v213 = vsel %vm124, %v101, 0
  %v216 = vsel %vm124, %v102, 0
  %v219 = vsel %vm124, %v103, 0
  %v222 = vsel %vm124, %v104, 0
  %v225 = vsel %vm124, %v105, 0
  %v228 = vsel %vm124, %v106, 0
  %v231 = vsel %vm124, %v107, 0
  %v234 = vsel %vm124, %v108, 0
  %v237 = vsel %vm124, %v109, 0
  %v240 = vsel %vm124, %v110, 0
  %v243 = vsel %vm124, %v111, 0
  %v246 = vsel %vm124, %v112, 0
  %v249 = vsel %vm124, %v113, 0
  %v252 = vsel %vm124, %v114, 0
  %v255 = vsel %vm124, %v115, 0
  %v258 = vsel %vm124, %v116, 0
  %v261 = vsel %vm124, %v117, 0
  %v264 = vsel %vm124, %v118, 0
  %v267 = vsel %vm124, %v119, 0
  %269 = vmatpush.msra.mxu0 0.0
  %270 = vmatpush.msra.mxu0 0.0
  %271 = vmatpush.msra.mxu0 0.0
  %272 = vmatpush.msra.mxu0 0.0
  %273 = vmatpush.msra.mxu0 0.0
  %274 = vmatpush.msra.mxu0 0.0
  %275 = vmatpush.msra.mxu0 0.0
  %276 = vmatpush.msra.mxu0 0.0
  %277 = vmatpush.msra.mxu0 0.0
  %278 = vmatpush.msra.mxu0 0.0
  %279 = vmatpush.msra.mxu0 0.0
  %280 = vmatpush.msra.mxu0 0.0
  %281 = vmatpush.msra.mxu0 %v123
  %282 = vmatpush.msra.mxu0 %v122
  %283 = vmatpush.msra.mxu0 %v121
  %284 = vmatpush.msra.mxu0 %v120
  %285 = vmatmul.f32.gmra.mxu0 %v126
  %v286 = vpop.f32.mrf.mxu0
  %v287 = vadd.f32 0.0, %v286
  %288 = vmatmul.f32.gmra.mxu0 %v129
  %v289 = vpop.f32.mrf.mxu0
  %v290 = vadd.f32 0.0, %v289
  %291 = vmatmul.f32.gmra.mxu0 %v132
  %v292 = vpop.f32.mrf.mxu0
  %v293 = vadd.f32 0.0, %v292
  %294 = vmatmul.f32.gmra.mxu0 %v135
  %v295 = vpop.f32.mrf.mxu0
  %v296 = vadd.f32 0.0, %v295
  %297 = vmatmul.f32.gmra.mxu0 %v138
  %v298 = vpop.f32.mrf.mxu0
  %v299 = vadd.f32 0.0, %v298
  %300 = vmatmul.f32.gmra.mxu0 %v141
  %v301 = vpop.f32.mrf.mxu0
  %v302 = vadd.f32 0.0, %v301
  %303 = vmatmul.f32.gmra.mxu0 %v144
  %v304 = vpop.f32.mrf.mxu0
  %v305 = vadd.f32 0.0, %v304
  %306 = vmatmul.f32.gmra.mxu0 %v147
  %v307 = vpop.f32.mrf.mxu0
  %v308 = vadd.f32 0.0, %v307
  %309 = vmatmul.f32.gmra.mxu0 %v150
  %v310 = vpop.f32.mrf.mxu0
  %v311 = vadd.f32 0.0, %v310
  %312 = vmatmul.f32.gmra.mxu0 %v153
  %v313 = vpop.f32.mrf.mxu0
  %v314 = vadd.f32 0.0, %v313
  %315 = vmatmul.f32.gmra.mxu0 %v156
  %v316 = vpop.f32.mrf.mxu0
  %v317 = vadd.f32 0.0, %v316
  %318 = vmatmul.f32.gmra.mxu0 %v159
  %v319 = vpop.f32.mrf.mxu0
  %v320 = vadd.f32 0.0, %v319
  %321 = vmatmul.f32.gmra.mxu0 %v162
  %v322 = vpop.f32.mrf.mxu0
  %v323 = vadd.f32 0.0, %v322
  %324 = vmatmul.f32.gmra.mxu0 %v165
  %v325 = vpop.f32.mrf.mxu0
  %v326 = vadd.f32 0.0, %v325
  %327 = vmatmul.f32.gmra.mxu0 %v168
  %v328 = vpop.f32.mrf.mxu0
  %v329 = vadd.f32 0.0, %v328
  %330 = vmatmul.f32.gmra.mxu0 %v171
  %v331 = vpop.f32.mrf.mxu0
  %v332 = vadd.f32 0.0, %v331
  %333 = vmatmul.f32.gmra.mxu0 %v174
  %v334 = vpop.f32.mrf.mxu0
  %v335 = vadd.f32 0.0, %v334
  %336 = vmatmul.f32.gmra.mxu0 %v177
  %v337 = vpop.f32.mrf.mxu0
  %v338 = vadd.f32 0.0, %v337
  %339 = vmatmul.f32.gmra.mxu0 %v180
  %v340 = vpop.f32.mrf.mxu0
  %v341 = vadd.f32 0.0, %v340
  %342 = vmatmul.f32.gmra.mxu0 %v183
  %v343 = vpop.f32.mrf.mxu0
  %v344 = vadd.f32 0.0, %v343
  %345 = vmatmul.f32.gmra.mxu0 %v186
  %v346 = vpop.f32.mrf.mxu0
  %v347 = vadd.f32 0.0, %v346
  %348 = vmatmul.f32.gmra.mxu0 %v189
  %v349 = vpop.f32.mrf.mxu0
  %v350 = vadd.f32 0.0, %v349
  %351 = vmatmul.f32.gmra.mxu0 %v192
  %v352 = vpop.f32.mrf.mxu0
  %v353 = vadd.f32 0.0, %v352
  %354 = vmatmul.f32.gmra.mxu0 %v195
  %v355 = vpop.f32.mrf.mxu0
  %v356 = vadd.f32 0.0, %v355
  %357 = vmatmul.f32.gmra.mxu0 %v198
  %v358 = vpop.f32.mrf.mxu0
  %v359 = vadd.f32 0.0, %v358
  %360 = vmatmul.f32.gmra.mxu0 %v201
  %v361 = vpop.f32.mrf.mxu0
  %v362 = vadd.f32 0.0, %v361
  %363 = vmatmul.f32.gmra.mxu0 %v204
  %v364 = vpop.f32.mrf.mxu0
  %v365 = vadd.f32 0.0, %v364
  %366 = vmatmul.f32.gmra.mxu0 %v207
  %v367 = vpop.f32.mrf.mxu0
  %v368 = vadd.f32 0.0, %v367
  %369 = vmatmul.f32.gmra.mxu0 %v210
  %v370 = vpop.f32.mrf.mxu0
  %v371 = vadd.f32 0.0, %v370
  %372 = vmatmul.f32.gmra.mxu0 %v213
  %v373 = vpop.f32.mrf.mxu0
  %v374 = vadd.f32 0.0, %v373
  %375 = vmatmul.f32.gmra.mxu0 %v216
  %v376 = vpop.f32.mrf.mxu0
  %v377 = vadd.f32 0.0, %v376
  %378 = vmatmul.f32.gmra.mxu0 %v219
  %v379 = vpop.f32.mrf.mxu0
  %v380 = vadd.f32 0.0, %v379
  %381 = vmatmul.f32.gmra.mxu0 %v222
  %v382 = vpop.f32.mrf.mxu0
  %v383 = vadd.f32 0.0, %v382
  %384 = vmatmul.f32.gmra.mxu0 %v225
  %v385 = vpop.f32.mrf.mxu0
  %v386 = vadd.f32 0.0, %v385
  %387 = vmatmul.f32.gmra.mxu0 %v228
  %v388 = vpop.f32.mrf.mxu0
  %v389 = vadd.f32 0.0, %v388
  %390 = vmatmul.f32.gmra.mxu0 %v231
  %v391 = vpop.f32.mrf.mxu0
  %v392 = vadd.f32 0.0, %v391
  %393 = vmatmul.f32.gmra.mxu0 %v234
  %v394 = vpop.f32.mrf.mxu0
  %v395 = vadd.f32 0.0, %v394
  %396 = vmatmul.f32.gmra.mxu0 %v237
  %v397 = vpop.f32.mrf.mxu0
  %v398 = vadd.f32 0.0, %v397
  %399 = vmatmul.f32.gmra.mxu0 %v240
  %v400 = vpop.f32.mrf.mxu0
  %v401 = vadd.f32 0.0, %v400
  %402 = vmatmul.f32.gmra.mxu0 %v243
  %v403 = vpop.f32.mrf.mxu0
  %v404 = vadd.f32 0.0, %v403
  %405 = vmatmul.f32.gmra.mxu0 %v246
  %v406 = vpop.f32.mrf.mxu0
  %v407 = vadd.f32 0.0, %v406
  %408 = vmatmul.f32.gmra.mxu0 %v249
  %v409 = vpop.f32.mrf.mxu0
  %v410 = vadd.f32 0.0, %v409
  %411 = vmatmul.f32.gmra.mxu0 %v252
  %v412 = vpop.f32.mrf.mxu0
  %v413 = vadd.f32 0.0, %v412
  %414 = vmatmul.f32.gmra.mxu0 %v255
  %v415 = vpop.f32.mrf.mxu0
  %v416 = vadd.f32 0.0, %v415
  %417 = vmatmul.f32.gmra.mxu0 %v258
  %v418 = vpop.f32.mrf.mxu0
  %v419 = vadd.f32 0.0, %v418
  %420 = vmatmul.f32.gmra.mxu0 %v261
  %v421 = vpop.f32.mrf.mxu0
  %v422 = vadd.f32 0.0, %v421
  %423 = vmatmul.f32.gmra.mxu0 %v264
  %v424 = vpop.f32.mrf.mxu0
  %v425 = vadd.f32 0.0, %v424
  %426 = vmatmul.f32.gmra.mxu0 %v267
  %v427 = vpop.f32.mrf.mxu0
  %v428 = vadd.f32 0.0, %v427
  %429 = vdwg.mxu0
  %v431 = vsel %vm124, %v20, 0
  %v434 = vsel %vm124, %v21, 0
  %v437 = vsel %vm124, %v22, 0
  %v440 = vsel %vm124, %v23, 0
  %v443 = vsel %vm124, %v24, 0
  %v446 = vsel %vm124, %v25, 0
  %v449 = vsel %vm124, %v26, 0
  %v452 = vsel %vm124, %v27, 0
  %v455 = vsel %vm124, %v28, 0
  %v458 = vsel %vm124, %v29, 0
  %v461 = vsel %vm124, %v30, 0
  %v464 = vsel %vm124, %v31, 0
  %v467 = vsel %vm124, %v32, 0
  %v470 = vsel %vm124, %v33, 0
  %v473 = vsel %vm124, %v34, 0
  %v476 = vsel %vm124, %v35, 0
  %v479 = vsel %vm124, %v36, 0
  %v482 = vsel %vm124, %v37, 0
  %v485 = vsel %vm124, %v38, 0
  %v488 = vsel %vm124, %v39, 0
  %v491 = vsel %vm124, %v40, 0
  %v494 = vsel %vm124, %v41, 0
  %v497 = vsel %vm124, %v42, 0
  %v500 = vsel %vm124, %v43, 0
  %v503 = vsel %vm124, %v44, 0
  %v506 = vsel %vm124, %v45, 0
  %v509 = vsel %vm124, %v46, 0
  %v512 = vsel %vm124, %v47, 0
  %v515 = vsel %vm124, %v48, 0
  %v518 = vsel %vm124, %v49, 0
  %v521 = vsel %vm124, %v50, 0
  %v524 = vsel %vm124, %v51, 0
  %v527 = vsel %vm124, %v52, 0
  %v530 = vsel %vm124, %v53, 0
  %v533 = vsel %vm124, %v54, 0
  %v536 = vsel %vm124, %v55, 0
  %v539 = vsel %vm124, %v56, 0
  %v542 = vsel %vm124, %v57, 0
  %v545 = vsel %vm124, %v58, 0
  %v548 = vsel %vm124, %v59, 0
  %v551 = vsel %vm124, %v60, 0
  %v554 = vsel %vm124, %v61, 0
  %v557 = vsel %vm124, %v62, 0
  %v560 = vsel %vm124, %v63, 0
  %v563 = vsel %vm124, %v64, 0
  %v566 = vsel %vm124, %v65, 0
  %v569 = vsel %vm124, %v66, 0
  %v572 = vsel %vm124, %v67, 0
  %574 = vmatpush.msra.mxu0 0.0
  %575 = vmatpush.msra.mxu0 0.0
  %576 = vmatpush.msra.mxu0 0.0
  %577 = vmatpush.msra.mxu0 0.0
  %578 = vmatpush.msra.mxu0 0.0
  %579 = vmatpush.msra.mxu0 0.0
  %580 = vmatpush.msra.mxu0 0.0
  %581 = vmatpush.msra.mxu0 0.0
  %582 = vmatpush.msra.mxu0 0.0
  %583 = vmatpush.msra.mxu0 0.0
  %584 = vmatpush.msra.mxu0 0.0
  %585 = vmatpush.msra.mxu0 0.0
  %586 = vmatpush.msra.mxu0 %v71
  %587 = vmatpush.msra.mxu0 %v70
  %588 = vmatpush.msra.mxu0 %v69
  %589 = vmatpush.msra.mxu0 %v68
  %590 = vmatmul.f32.gmra.mxu0 %v431
  %v591 = vpop.f32.mrf.mxu0
  %v592 = vadd.f32 %v287, %v591
  %593 = vmatmul.f32.gmra.mxu0 %v434
  %v594 = vpop.f32.mrf.mxu0
  %v595 = vadd.f32 %v290, %v594
  %596 = vmatmul.f32.gmra.mxu0 %v437
  %v597 = vpop.f32.mrf.mxu0
  %v598 = vadd.f32 %v293, %v597
  %599 = vmatmul.f32.gmra.mxu0 %v440
  %v600 = vpop.f32.mrf.mxu0
  %v601 = vadd.f32 %v296, %v600
  %602 = vmatmul.f32.gmra.mxu0 %v443
  %v603 = vpop.f32.mrf.mxu0
  %v604 = vadd.f32 %v299, %v603
  %605 = vmatmul.f32.gmra.mxu0 %v446
  %v606 = vpop.f32.mrf.mxu0
  %v607 = vadd.f32 %v302, %v606
  %608 = vmatmul.f32.gmra.mxu0 %v449
  %v609 = vpop.f32.mrf.mxu0
  %v610 = vadd.f32 %v305, %v609
  %611 = vmatmul.f32.gmra.mxu0 %v452
  %v612 = vpop.f32.mrf.mxu0
  %v613 = vadd.f32 %v308, %v612
  %614 = vmatmul.f32.gmra.mxu0 %v455
  %v615 = vpop.f32.mrf.mxu0
  %v616 = vadd.f32 %v311, %v615
  %617 = vmatmul.f32.gmra.mxu0 %v458
  %v618 = vpop.f32.mrf.mxu0
  %v619 = vadd.f32 %v314, %v618
  %620 = vmatmul.f32.gmra.mxu0 %v461
  %v621 = vpop.f32.mrf.mxu0
  %v622 = vadd.f32 %v317, %v621
  %623 = vmatmul.f32.gmra.mxu0 %v464
  %v624 = vpop.f32.mrf.mxu0
  %v625 = vadd.f32 %v320, %v624
  %626 = vmatmul.f32.gmra.mxu0 %v467
  %v627 = vpop.f32.mrf.mxu0
  %v628 = vadd.f32 %v323, %v627
  %629 = vmatmul.f32.gmra.mxu0 %v470
  %v630 = vpop.f32.mrf.mxu0
  %v631 = vadd.f32 %v326, %v630
  %632 = vmatmul.f32.gmra.mxu0 %v473
  %v633 = vpop.f32.mrf.mxu0
  %v634 = vadd.f32 %v329, %v633
  %635 = vmatmul.f32.gmra.mxu0 %v476
  %v636 = vpop.f32.mrf.mxu0
  %v637 = vadd.f32 %v332, %v636
  %638 = vmatmul.f32.gmra.mxu0 %v479
  %v639 = vpop.f32.mrf.mxu0
  %v640 = vadd.f32 %v335, %v639
  %641 = vmatmul.f32.gmra.mxu0 %v482
  %v642 = vpop.f32.mrf.mxu0
  %v643 = vadd.f32 %v338, %v642
  %644 = vmatmul.f32.gmra.mxu0 %v485
  %v645 = vpop.f32.mrf.mxu0
  %v646 = vadd.f32 %v341, %v645
  %647 = vmatmul.f32.gmra.mxu0 %v488
  %v648 = vpop.f32.mrf.mxu0
  %v649 = vadd.f32 %v344, %v648
  %650 = vmatmul.f32.gmra.mxu0 %v491
  %v651 = vpop.f32.mrf.mxu0
  %v652 = vadd.f32 %v347, %v651
  %653 = vmatmul.f32.gmra.mxu0 %v494
  %v654 = vpop.f32.mrf.mxu0
  %v655 = vadd.f32 %v350, %v654
  %656 = vmatmul.f32.gmra.mxu0 %v497
  %v657 = vpop.f32.mrf.mxu0
  %v658 = vadd.f32 %v353, %v657
  %659 = vmatmul.f32.gmra.mxu0 %v500
  %v660 = vpop.f32.mrf.mxu0
  %v661 = vadd.f32 %v356, %v660
  %662 = vmatmul.f32.gmra.mxu0 %v503
  %v663 = vpop.f32.mrf.mxu0
  %v664 = vadd.f32 %v359, %v663
  %665 = vmatmul.f32.gmra.mxu0 %v506
  %v666 = vpop.f32.mrf.mxu0
  %v667 = vadd.f32 %v362, %v666
  %668 = vmatmul.f32.gmra.mxu0 %v509
  %v669 = vpop.f32.mrf.mxu0
  %v670 = vadd.f32 %v365, %v669
  %671 = vmatmul.f32.gmra.mxu0 %v512
  %v672 = vpop.f32.mrf.mxu0
  %v673 = vadd.f32 %v368, %v672
  %674 = vmatmul.f32.gmra.mxu0 %v515
  %v675 = vpop.f32.mrf.mxu0
  %v676 = vadd.f32 %v371, %v675
  %677 = vmatmul.f32.gmra.mxu0 %v518
  %v678 = vpop.f32.mrf.mxu0
  %v679 = vadd.f32 %v374, %v678
  %680 = vmatmul.f32.gmra.mxu0 %v521
  %v681 = vpop.f32.mrf.mxu0
  %v682 = vadd.f32 %v377, %v681
  %683 = vmatmul.f32.gmra.mxu0 %v524
  %v684 = vpop.f32.mrf.mxu0
  %v685 = vadd.f32 %v380, %v684
  %686 = vmatmul.f32.gmra.mxu0 %v527
  %v687 = vpop.f32.mrf.mxu0
  %v688 = vadd.f32 %v383, %v687
  %689 = vmatmul.f32.gmra.mxu0 %v530
  %v690 = vpop.f32.mrf.mxu0
  %v691 = vadd.f32 %v386, %v690
  %692 = vmatmul.f32.gmra.mxu0 %v533
  %v693 = vpop.f32.mrf.mxu0
  %v694 = vadd.f32 %v389, %v693
  %695 = vmatmul.f32.gmra.mxu0 %v536
  %v696 = vpop.f32.mrf.mxu0
  %v697 = vadd.f32 %v392, %v696
  %698 = vmatmul.f32.gmra.mxu0 %v539
  %v699 = vpop.f32.mrf.mxu0
  %v700 = vadd.f32 %v395, %v699
  %701 = vmatmul.f32.gmra.mxu0 %v542
  %v702 = vpop.f32.mrf.mxu0
  %v703 = vadd.f32 %v398, %v702
  %704 = vmatmul.f32.gmra.mxu0 %v545
  %v705 = vpop.f32.mrf.mxu0
  %v706 = vadd.f32 %v401, %v705
  %707 = vmatmul.f32.gmra.mxu0 %v548
  %v708 = vpop.f32.mrf.mxu0
  %v709 = vadd.f32 %v404, %v708
  %710 = vmatmul.f32.gmra.mxu0 %v551
  %v711 = vpop.f32.mrf.mxu0
  %v712 = vadd.f32 %v407, %v711
  %713 = vmatmul.f32.gmra.mxu0 %v554
  %v714 = vpop.f32.mrf.mxu0
  %v715 = vadd.f32 %v410, %v714
  %716 = vmatmul.f32.gmra.mxu0 %v557
  %v717 = vpop.f32.mrf.mxu0
  %v718 = vadd.f32 %v413, %v717
  %719 = vmatmul.f32.gmra.mxu0 %v560
  %v720 = vpop.f32.mrf.mxu0
  %v721 = vadd.f32 %v416, %v720
  %722 = vmatmul.f32.gmra.mxu0 %v563
  %v723 = vpop.f32.mrf.mxu0
  %v724 = vadd.f32 %v419, %v723
  %725 = vmatmul.f32.gmra.mxu0 %v566
  %v726 = vpop.f32.mrf.mxu0
  %v727 = vadd.f32 %v422, %v726
  %728 = vmatmul.f32.gmra.mxu0 %v569
  %v729 = vpop.f32.mrf.mxu0
  %v730 = vadd.f32 %v425, %v729
  %731 = vmatmul.f32.gmra.mxu0 %v572
  %v732 = vpop.f32.mrf.mxu0
  %v733 = vadd.f32 %v428, %v732
  %734 = vdwg.mxu0
  %v735 = vld [vmem:[%s4] sm:$0x1]
  %v737 = vperm.slane %v735, 0
  %v739 = vadd.f32 %v592, %v737
  %v740 = vadd.f32 %v595, %v737
  %v741 = vadd.f32 %v598, %v737
  %v742 = vadd.f32 %v601, %v737
  %v743 = vadd.f32 %v604, %v737
  %v744 = vadd.f32 %v607, %v737
  %v745 = vadd.f32 %v610, %v737
  %v746 = vadd.f32 %v613, %v737
  %v747 = vadd.f32 %v616, %v737
  %v748 = vadd.f32 %v619, %v737
  %v749 = vadd.f32 %v622, %v737
  %v750 = vadd.f32 %v625, %v737
  %v751 = vadd.f32 %v628, %v737
  %v752 = vadd.f32 %v631, %v737
  %v753 = vadd.f32 %v634, %v737
  %v754 = vadd.f32 %v637, %v737
  %v755 = vadd.f32 %v640, %v737
  %v756 = vadd.f32 %v643, %v737
  %v757 = vadd.f32 %v646, %v737
  %v758 = vadd.f32 %v649, %v737
  %v759 = vadd.f32 %v652, %v737
  %v760 = vadd.f32 %v655, %v737
  %v761 = vadd.f32 %v658, %v737
  %v762 = vadd.f32 %v661, %v737
  %v763 = vadd.f32 %v664, %v737
  %v764 = vadd.f32 %v667, %v737
  %v765 = vadd.f32 %v670, %v737
  %v766 = vadd.f32 %v673, %v737
  %v767 = vadd.f32 %v676, %v737
  %v768 = vadd.f32 %v679, %v737
  %v769 = vadd.f32 %v682, %v737
  %v770 = vadd.f32 %v685, %v737
  %v771 = vadd.f32 %v688, %v737
  %v772 = vadd.f32 %v691, %v737
  %v773 = vadd.f32 %v694, %v737
  %v774 = vadd.f32 %v697, %v737
  %v775 = vadd.f32 %v700, %v737
  %v776 = vadd.f32 %v703, %v737
  %v777 = vadd.f32 %v706, %v737
  %v778 = vadd.f32 %v709, %v737
  %v779 = vadd.f32 %v712, %v737
  %v780 = vadd.f32 %v715, %v737
  %v781 = vadd.f32 %v718, %v737
  %v782 = vadd.f32 %v721, %v737
  %v783 = vadd.f32 %v724, %v737
  %v784 = vadd.f32 %v727, %v737
  %v785 = vadd.f32 %v730, %v737
  %v786 = vadd.f32 %v733, %v737
  %vm787 = vcmask 64512
  %788 = vst.msk [vmem:[%s5] sm:$0xff] %vm787, %v739
  %789 = vst.msk [vmem:[%s5 + $0x8] sm:$0xff] %vm787, %v740
  %790 = vst.msk [vmem:[%s5 + $0x10] sm:$0xff] %vm787, %v741
  %791 = vst.msk [vmem:[%s5 + $0x18] sm:$0xff] %vm787, %v742
  %792 = vst.msk [vmem:[%s5 + $0x20] sm:$0xff] %vm787, %v743
  %793 = vst.msk [vmem:[%s5 + $0x28] sm:$0xff] %vm787, %v744
  %794 = vst.msk [vmem:[%s5 + $0x30] sm:$0xff] %vm787, %v745
  %795 = vst.msk [vmem:[%s5 + $0x38] sm:$0xff] %vm787, %v746
  %796 = vst.msk [vmem:[%s5 + $0x40] sm:$0xff] %vm787, %v747
  %797 = vst.msk [vmem:[%s5 + $0x48] sm:$0xff] %vm787, %v748
  %798 = vst.msk [vmem:[%s5 + $0x50] sm:$0xff] %vm787, %v749
  %799 = vst.msk [vmem:[%s5 + $0x58] sm:$0xff] %vm787, %v750
  %800 = vst.msk [vmem:[%s5 + $0x60] sm:$0xff] %vm787, %v751
  %801 = vst.msk [vmem:[%s5 + $0x68] sm:$0xff] %vm787, %v752
  %802 = vst.msk [vmem:[%s5 + $0x70] sm:$0xff] %vm787, %v753
  %803 = vst.msk [vmem:[%s5 + $0x78] sm:$0xff] %vm787, %v754
  %804 = vst.msk [vmem:[%s5 + $0x80] sm:$0xff] %vm787, %v755
  %805 = vst.msk [vmem:[%s5 + $0x88] sm:$0xff] %vm787, %v756
  %806 = vst.msk [vmem:[%s5 + $0x90] sm:$0xff] %vm787, %v757
  %807 = vst.msk [vmem:[%s5 + $0x98] sm:$0xff] %vm787, %v758
  %808 = vst.msk [vmem:[%s5 + $0xa0] sm:$0xff] %vm787, %v759
  %809 = vst.msk [vmem:[%s5 + $0xa8] sm:$0xff] %vm787, %v760
  %810 = vst.msk [vmem:[%s5 + $0xb0] sm:$0xff] %vm787, %v761
  %811 = vst.msk [vmem:[%s5 + $0xb8] sm:$0xff] %vm787, %v762
  %812 = vst.msk [vmem:[%s5 + $0xc0] sm:$0xff] %vm787, %v763
  %813 = vst.msk [vmem:[%s5 + $0xc8] sm:$0xff] %vm787, %v764
  %814 = vst.msk [vmem:[%s5 + $0xd0] sm:$0xff] %vm787, %v765
  %815 = vst.msk [vmem:[%s5 + $0xd8] sm:$0xff] %vm787, %v766
  %816 = vst.msk [vmem:[%s5 + $0xe0] sm:$0xff] %vm787, %v767
  %817 = vst.msk [vmem:[%s5 + $0xe8] sm:$0xff] %vm787, %v768
  %818 = vst.msk [vmem:[%s5 + $0xf0] sm:$0xff] %vm787, %v769
  %819 = vst.msk [vmem:[%s5 + $0xf8] sm:$0xff] %vm787, %v770
  %820 = vst.msk [vmem:[%s5 + $0x100] sm:$0xff] %vm787, %v771
  %821 = vst.msk [vmem:[%s5 + $0x108] sm:$0xff] %vm787, %v772
  %822 = vst.msk [vmem:[%s5 + $0x110] sm:$0xff] %vm787, %v773
  %823 = vst.msk [vmem:[%s5 + $0x118] sm:$0xff] %vm787, %v774
  %824 = vst.msk [vmem:[%s5 + $0x120] sm:$0xff] %vm787, %v775
  %825 = vst.msk [vmem:[%s5 + $0x128] sm:$0xff] %vm787, %v776
  %826 = vst.msk [vmem:[%s5 + $0x130] sm:$0xff] %vm787, %v777
  %827 = vst.msk [vmem:[%s5 + $0x138] sm:$0xff] %vm787, %v778
  %828 = vst.msk [vmem:[%s5 + $0x140] sm:$0xff] %vm787, %v779
  %829 = vst.msk [vmem:[%s5 + $0x148] sm:$0xff] %vm787, %v780
  %830 = vst.msk [vmem:[%s5 + $0x150] sm:$0xff] %vm787, %v781
  %831 = vst.msk [vmem:[%s5 + $0x158] sm:$0xff] %vm787, %v782
  %832 = vst.msk [vmem:[%s5 + $0x160] sm:$0xff] %vm787, %v783
  %833 = vst.msk [vmem:[%s5 + $0x168] sm:$0xff] %vm787, %v784
  %834 = vst.msk [vmem:[%s5 + $0x170] sm:$0xff] %vm787, %v785
  %835 = vst.msk [vmem:[%s5 + $0x178] sm:$0xff] %vm787, %v786
  // Predicated region
  $region22: #{tpu_custom_call.1} parent=0 // pred_check
    _
  $region23: #{tpu_custom_call.1} parent=0 // pred_check_branch
    %837 = sbr.rel (0) target = $region25
  $region24: #{tpu_custom_call.1} parent=0 // pred_region
    _
  $region25: #{tpu_custom_call.1} parent=0 // pred_fallthru
    _
  // Predicated region
  $region26: #{tpu_custom_call.1} parent=0 // pred_check
    _
  $region27: #{tpu_custom_call.1} parent=0 // pred_check_branch
    %839 = sbr.rel (0) target = $region29
  $region28: #{tpu_custom_call.1} parent=0 // pred_region
    _
  $region29: #{tpu_custom_call.1} parent=0 // pred_fallthru
    _

</llo_original>
